<compile_context>
chip_gen: v6e
topology: v6e:2x2x1
jax: 0.10.0
libtpu: 0.0.40
codegen_flags: <defaults>
</compile_context>

<pallas_src>
import functools

import jax
import jax.numpy as jnp
import numpy as np
from jax.experimental import pallas as pl
from jax.experimental.pallas import tpu as pltpu

LANE = 128            # TPU lane width; small feature dims (C=10, H, L) pad to this
_TARGET_TILE_B = 1024  # ~1 MB of f32 input rows per tile -> ~85%+ of DMA roofline


def _round_up(n, m):
    return ((n + m - 1) // m) * m


def _choose_tiles(B):
    """Pick (grid_size, tile_b) for the batch axis.

    * B > 1024   : ~1024-row tiles (double-buffered footprint ~10-14 MB, well
                   inside the v7x 64 MiB physical VMEM).
    * 512 <= B   : two roughly equal tiles so the "parallel" axis can feed both
                   TensorCores.
    * small B    : one block equal to the full batch (legal for any B since the
                   block equals the full array dim; no padding / OOB rows).
    """
    if B > _TARGET_TILE_B:
        n_tiles = pl.cdiv(B, _TARGET_TILE_B)
    elif B >= 512:
        n_tiles = 2
    else:
        return 1, B
    tile_b = _round_up(pl.cdiv(B, n_tiles), 8)
    return pl.cdiv(B, tile_b), tile_b


def _cae_kernel(x_ref, y_ref, w1x_ref, w1y_ref, b1_ref, w23_ref, b23_ref,
                w3y_ref, w4_ref, b4_ref, out_ref, *, compute_dtype):
    """One batch tile of the fused conditional-AE forward.

    x_ref  : (TB, D)  image rows in the caller's dtype
    y_ref  : (TB, 1)  int32 class ids
    out_ref: (TB, D)  reconstruction (out dtype may be narrower than f32)

    All padded weight/bias entries are exactly zero, so padding lanes of the
    intermediates stay zero and never leak into real lanes.
    """
    x = x_ref[...].astype(compute_dtype)                  # (TB, D)
    labels = y_ref[...]                                   # (TB, 1) int32
    # one-hot built in-kernel (VPU work, hidden under the input DMA)
    onehot = (jax.lax.broadcasted_iota(jnp.int32, (x.shape[0], LANE), 1)
              == labels).astype(compute_dtype)            # (TB, 128)

    # ----- encoder: h1 = relu(x @ W1x + onehot @ W1y + b1) -----
    h1 = (jnp.dot(x, w1x_ref[...], preferred_element_type=jnp.float32)
          + jnp.dot(onehot, w1y_ref[...], preferred_element_type=jnp.float32)
          + b1_ref[...])
    h1 = jnp.maximum(h1, 0.0)                             # f32 ReLU (VPU)

    # ----- folded latent projection + decoder hidden -----
    # z = h1 @ W2 + b2 ; h2 = relu(z @ W3z + onehot @ W3y + b3)
    #   == relu(h1 @ (W2 @ W3z) + onehot @ W3y + (b2 @ W3z + b3))
    h2 = (jnp.dot(h1.astype(compute_dtype), w23_ref[...],
                  preferred_element_type=jnp.float32)
          + jnp.dot(onehot, w3y_ref[...], preferred_element_type=jnp.float32)
          + b23_ref[...])
    h2 = jnp.maximum(h2, 0.0)                             # f32 ReLU (VPU)

    # ----- output layer -----
    logits = (jnp.dot(h2.astype(compute_dtype), w4_ref[...],
                      preferred_element_type=jnp.float32) + b4_ref[...])
    out_ref[...] = jax.nn.sigmoid(logits).astype(out_ref.dtype)  # f32 sigmoid (EUP)


def _pack_params(p, D, C, H, L, compute_dtype):
    """Zero-pad small feature dims to 128 lanes and fold W2 @ W3z / b2 @ W3z + b3."""
    Cp = Hp = LANE
    f32 = jnp.float32
    hi = jax.lax.Precision.HIGHEST

    w1x = jnp.zeros((D, Hp), f32).at[:, :H].set(p["w1x"])
    w1y = jnp.zeros((Cp, Hp), f32).at[:C, :H].set(p["w1y"])
    b1 = jnp.zeros((1, Hp), f32).at[:, :H].set(p["b1"])

    # Fold the latent projection (valid for this inference forward only: z is
    # never an output, and there is no nonlinearity between z and W3z).
    w23 = jnp.dot(p["w2"], p["w3z"], precision=hi)               # (H, H)
    b23 = jnp.dot(p["b2"], p["w3z"], precision=hi) + p["b3"]     # (1, H)
    w23p = jnp.zeros((Hp, Hp), f32).at[:H, :H].set(w23)
    b23p = jnp.zeros((1, Hp), f32).at[:, :H].set(b23)

    w3y = jnp.zeros((Cp, Hp), f32).at[:C, :H].set(p["w3y"])
    w4 = jnp.zeros((Hp, D), f32).at[:H, :].set(p["w4"])
    b4 = p["b4"].astype(f32).reshape(1, D)

    cdt = compute_dtype
    # matmul operands in compute dtype; biases (f32 epilogue) stay f32
    return (w1x.astype(cdt), w1y.astype(cdt), b1,
            w23p.astype(cdt), b23p,
            w3y.astype(cdt), w4.astype(cdt), b4)


def conditional_ae_forward(x_flat, y_ids, params, *, num_classes, hidden, latent,
                           compute_dtype=jnp.bfloat16, out_dtype=None):
    """Fused conditional-AE forward.

    x_flat : (B, D) images, any float dtype (cast to `compute_dtype` in-kernel;
             pass bf16 directly if the producer already holds bf16 activations).
    y_ids  : (B,) integer class ids.
    Returns (B, D) in `out_dtype` (default: x_flat.dtype).
    Note: with compute_dtype=bf16 the matmul operands (incl. x) are quantized to
    bf16; accumulation and the bias/ReLU/sigmoid epilogue stay f32.
    """
    B, D = x_flat.shape
    assert D % LANE == 0, "flattened image dim must be lane-aligned (16*16=256 is)"
    assert params["w2"].shape == (hidden, latent)
    out_dtype = x_flat.dtype if out_dtype is None else out_dtype

    packed = _pack_params(params, D, num_classes, hidden, latent, compute_dtype)
    labels = y_ids.astype(jnp.int32).reshape(B, 1)        # 4 bytes/row of HBM traffic

    grid_b, tile_b = _choose_tiles(B)

    data_map = lambda i: (i, 0)
    const_map = lambda i: (0, 0)
    in_specs = [pl.BlockSpec((tile_b, D), data_map),       # x rows (auto double-buffered)
                pl.BlockSpec((tile_b, 1), data_map)]       # labels
    # Weights/biases: constant index maps keep them VMEM-resident across tiles.
    # Their total double-buffered footprint is < 0.5 MB, so default pipelining
    # is kept (single-buffering them would only save ~0.2-0.3 MB).
    in_specs += [pl.BlockSpec(a.shape, const_map) for a in packed]
    out_spec = pl.BlockSpec((tile_b, D), data_map)

    # VMEM budget: no double-counting of the double-buffering this time.
    x_item = jnp.dtype(x_flat.dtype).itemsize
    o_item = jnp.dtype(out_dtype).itemsize
    c_item = jnp.dtype(compute_dtype).itemsize
    weight_bytes = sum(2 * int(a.size) * jnp.dtype(a.dtype).itemsize for a in packed)
    io_bytes = (2 * tile_b * D * x_item          # input tiles (double-buffered)
                + 2 * tile_b * LANE * 4          # (tile_b,1) label tile pads to 128 lanes in VMEM
                + 2 * tile_b * D * o_item)       # output tiles
    interm_bytes = tile_b * (LANE * c_item       # onehot
                             + 2 * LANE * 4      # h1, h2 (f32)
                             + D * 4             # logits (f32)
                             + D * o_item)       # sigmoid result before store
    est = weight_bytes + io_bytes + interm_bytes
    vmem_limit = int(min(64 * 1024 * 1024, max(16 * 1024 * 1024, est + est // 2)))

    # If the last tile overhangs B (ragged batch), Pallas clamps the edge DMAs:
    # the overhang rows compute on garbage but are never written back.
    out = pl.pallas_call(
        functools.partial(_cae_kernel, compute_dtype=compute_dtype),
        out_shape=jax.ShapeDtypeStruct((B, D), out_dtype),
        grid=(grid_b,),
        in_specs=in_specs,
        out_specs=out_spec,
        compiler_params=pltpu.CompilerParams(
            dimension_semantics=("parallel",),   # independent batch tiles -> both TCs
            vmem_limit_bytes=vmem_limit),
    )(x_flat, labels, *packed)
    return out


def init_params(key, D, C, H, L):
    ks = jax.random.split(key, 8)
    s = 0.05
    return {
        # encoder: Linear(D+C -> H), Linear(H -> L)
        "w1x": s * jax.random.normal(ks[0], (D, H), jnp.float32),
        "w1y": s * jax.random.normal(ks[1], (C, H), jnp.float32),
        "b1":  s * jax.random.normal(ks[2], (1, H), jnp.float32),
        "w2":  s * jax.random.normal(ks[3], (H, L), jnp.float32),
        "b2":  s * jax.random.normal(ks[4], (1, L), jnp.float32),
        # decoder: Linear(L+C -> H), Linear(H -> D)
        "w3z": s * jax.random.normal(ks[5], (L, H), jnp.float32),
        "w3y": s * jax.random.normal(ks[6], (C, H), jnp.float32),
        "b3":  jnp.zeros((1, H), jnp.float32),
        "w4":  s * jax.random.normal(ks[7], (H, D), jnp.float32),
        "b4":  jnp.zeros((1, D), jnp.float32),
    }


def reference_forward(x_flat, y_onehot, p):
    """Pure-JAX reference mirroring the PyTorch encoder/decoder semantics (unfused)."""
    dot = functools.partial(jnp.dot, precision=jax.lax.Precision.HIGHEST)
    h1 = jnp.maximum(dot(x_flat, p["w1x"]) + dot(y_onehot, p["w1y"]) + p["b1"], 0.0)
    z = dot(h1, p["w2"]) + p["b2"]
    h2 = jnp.maximum(dot(z, p["w3z"]) + dot(y_onehot, p["w3y"]) + p["b3"], 0.0)
    return jax.nn.sigmoid(dot(h2, p["w4"]) + p["b4"])


if __name__ == "__main__":
    C_img, Himg, Wimg = 1, 16, 16
    D = C_img * Himg * Wimg                  # 256 flattened features
    C = 10                                   # number of classes (MNIST)
    HID = 64                                 # hidden width
    LAT = 16                                 # latent dim

    key = jax.random.PRNGKey(0)
    k_x, k_y, k_p, k_x2, k_y2 = jax.random.split(key, 5)
    params = init_params(k_p, D, C, HID, LAT)

    # --- tiny batch (single full-array block), f32 compute path, f32 output ---
    B = 2
    x = jax.random.normal(k_x, (B, C_img, Himg, Wimg), jnp.float32)   # NCHW
    y = jax.random.randint(k_y, (B,), 0, C)                           # class ids
    x_flat = x.reshape(B, D)                                          # flatten NCHW -> (B, D)

    ref = reference_forward(x_flat, jax.nn.one_hot(y, C, dtype=jnp.float32), params)
    out_f32 = conditional_ae_forward(x_flat, y, params, num_classes=C,
                                     hidden=HID, latent=LAT,
                                     compute_dtype=jnp.float32)
    out_f32 = jax.block_until_ready(out_f32)
    np.testing.assert_allclose(np.asarray(out_f32), np.asarray(ref),
                               rtol=2e-5, atol=2e-5)
    assert out_f32.shape == (B, D) and out_f32.dtype == jnp.float32

    # --- moderate batch: two 264-row tiles on the parallel grid axis,
    #     default bf16 matmuls (f32 accumulation/epilogue), bf16 output stream ---
    B2 = 528
    x2 = jax.random.normal(k_x2, (B2, C_img, Himg, Wimg), jnp.float32).reshape(B2, D)
    y2 = jax.random.randint(k_y2, (B2,), 0, C)
    ref2 = reference_forward(x2, jax.nn.one_hot(y2, C, dtype=jnp.float32), params)
    out_bf16 = conditional_ae_forward(x2, y2, params, num_classes=C,
                                      hidden=HID, latent=LAT,
                                      out_dtype=jnp.bfloat16)
    out_bf16 = jax.block_until_ready(out_bf16)
    np.testing.assert_allclose(np.asarray(out_bf16.astype(jnp.float32)),
                               np.asarray(ref2), rtol=5e-2, atol=5e-2)
    assert out_bf16.shape == (B2, D) and out_bf16.dtype == jnp.bfloat16

    print("KERNEL_OK")
</pallas_src>

<mosaic_0001>
module attributes {stable_mosaic.version = 11 : i64} {
  func.func @_cae_kernel(%arg0: i32, %arg1: memref<2x256xf32, #tpu.memory_space<vmem>>, %arg2: memref<2x1xi32, #tpu.memory_space<vmem>>, %arg3: memref<256x128xf32, #tpu.memory_space<vmem>>, %arg4: memref<128x128xf32, #tpu.memory_space<vmem>>, %arg5: memref<1x128xf32, #tpu.memory_space<vmem>>, %arg6: memref<128x128xf32, #tpu.memory_space<vmem>>, %arg7: memref<1x128xf32, #tpu.memory_space<vmem>>, %arg8: memref<128x128xf32, #tpu.memory_space<vmem>>, %arg9: memref<128x256xf32, #tpu.memory_space<vmem>>, %arg10: memref<1x256xf32, #tpu.memory_space<vmem>>, %arg11: memref<2x256xf32, #tpu.memory_space<vmem>>) attributes {dimension_semantics = [#tpu.dimension_semantics<parallel>], iteration_bounds = array<i64: 1>, scalar_prefetch = 0 : i64, scratch_operands = 0 : i64, tpu.core_type = #tpu.core_type<tc>, window_params = [{transform_indices = @transform_0, window_bounds = array<i64: 2, 256>}, {transform_indices = @transform_1, window_bounds = array<i64: 2, 1>}, {pipeline_mode = #tpu.pipeline_mode<synchronous>, transform_indices = @transform_2, window_bounds = array<i64: 256, 128>}, {pipeline_mode = #tpu.pipeline_mode<synchronous>, transform_indices = @transform_3, window_bounds = array<i64: 128, 128>}, {pipeline_mode = #tpu.pipeline_mode<synchronous>, transform_indices = @transform_4, window_bounds = array<i64: 1, 128>}, {pipeline_mode = #tpu.pipeline_mode<synchronous>, transform_indices = @transform_5, window_bounds = array<i64: 128, 128>}, {pipeline_mode = #tpu.pipeline_mode<synchronous>, transform_indices = @transform_6, window_bounds = array<i64: 1, 128>}, {pipeline_mode = #tpu.pipeline_mode<synchronous>, transform_indices = @transform_7, window_bounds = array<i64: 128, 128>}, {pipeline_mode = #tpu.pipeline_mode<synchronous>, transform_indices = @transform_8, window_bounds = array<i64: 128, 256>}, {pipeline_mode = #tpu.pipeline_mode<synchronous>, transform_indices = @transform_9, window_bounds = array<i64: 1, 256>}, {transform_indices = @transform_10, window_bounds = array<i64: 2, 256>}]} {
    %c0 = arith.constant 0 : index
    %c0_0 = arith.constant 0 : index
    %0 = vector.load %arg1[%c0, %c0_0] : memref<2x256xf32, #tpu.memory_space<vmem>>, vector<2x256xf32>
    %c0_1 = arith.constant 0 : index
    %c0_2 = arith.constant 0 : index
    %1 = vector.load %arg2[%c0_1, %c0_2] : memref<2x1xi32, #tpu.memory_space<vmem>>, vector<2x1xi32>
    %2 = tpu.iota {dimensions = array<i32: 1>} : vector<2x128xi32>
    %3 = vector.broadcast %1 : vector<2x1xi32> to vector<2x128xi32>
    %4 = arith.cmpi eq, %2, %3 : vector<2x128xi32>
    %5 = arith.extui %4 : vector<2x128xi1> to vector<2x128xi32>
    %6 = arith.sitofp %5 : vector<2x128xi32> to vector<2x128xf32>
    %c0_3 = arith.constant 0 : index
    %c0_4 = arith.constant 0 : index
    %7 = vector.load %arg3[%c0_3, %c0_4] : memref<256x128xf32, #tpu.memory_space<vmem>>, vector<256x128xf32>
    %cst = arith.constant dense<0.000000e+00> : vector<2x128xf32>
    %8 = tpu.matmul %0, %7, %cst {dimension_numbers = #tpu.dot_dimension_numbers<[1], [0], [0], [1], [0, 0, 1, 1], [], []>} : vector<2x256xf32>, vector<256x128xf32>, vector<2x128xf32> -> vector<2x128xf32>
    %c0_5 = arith.constant 0 : index
    %c0_6 = arith.constant 0 : index
    %9 = vector.load %arg4[%c0_5, %c0_6] : memref<128x128xf32, #tpu.memory_space<vmem>>, vector<128x128xf32>
    %cst_7 = arith.constant dense<0.000000e+00> : vector<2x128xf32>
    %10 = tpu.matmul %6, %9, %cst_7 {dimension_numbers = #tpu.dot_dimension_numbers<[1], [0], [0], [1], [0, 0, 1, 1], [], []>} : vector<2x128xf32>, vector<128x128xf32>, vector<2x128xf32> -> vector<2x128xf32>
    %11 = arith.addf %8, %10 : vector<2x128xf32>
    %c0_8 = arith.constant 0 : index
    %c0_9 = arith.constant 0 : index
    %12 = vector.load %arg5[%c0_8, %c0_9] : memref<1x128xf32, #tpu.memory_space<vmem>>, vector<1x128xf32>
    %13 = vector.broadcast %12 : vector<1x128xf32> to vector<2x128xf32>
    %14 = arith.addf %11, %13 : vector<2x128xf32>
    %cst_10 = arith.constant 0.000000e+00 : f32
    %15 = vector.broadcast %cst_10 : f32 to vector<2x128xf32>
    %16 = arith.maximumf %14, %15 : vector<2x128xf32>
    %c0_11 = arith.constant 0 : index
    %c0_12 = arith.constant 0 : index
    %17 = vector.load %arg6[%c0_11, %c0_12] : memref<128x128xf32, #tpu.memory_space<vmem>>, vector<128x128xf32>
    %cst_13 = arith.constant dense<0.000000e+00> : vector<2x128xf32>
    %18 = tpu.matmul %16, %17, %cst_13 {dimension_numbers = #tpu.dot_dimension_numbers<[1], [0], [0], [1], [0, 0, 1, 1], [], []>} : vector<2x128xf32>, vector<128x128xf32>, vector<2x128xf32> -> vector<2x128xf32>
    %c0_14 = arith.constant 0 : index
    %c0_15 = arith.constant 0 : index
    %19 = vector.load %arg8[%c0_14, %c0_15] : memref<128x128xf32, #tpu.memory_space<vmem>>, vector<128x128xf32>
    %cst_16 = arith.constant dense<0.000000e+00> : vector<2x128xf32>
    %20 = tpu.matmul %6, %19, %cst_16 {dimension_numbers = #tpu.dot_dimension_numbers<[1], [0], [0], [1], [0, 0, 1, 1], [], []>} : vector<2x128xf32>, vector<128x128xf32>, vector<2x128xf32> -> vector<2x128xf32>
    %21 = arith.addf %18, %20 : vector<2x128xf32>
    %c0_17 = arith.constant 0 : index
    %c0_18 = arith.constant 0 : index
    %22 = vector.load %arg7[%c0_17, %c0_18] : memref<1x128xf32, #tpu.memory_space<vmem>>, vector<1x128xf32>
    %23 = vector.broadcast %22 : vector<1x128xf32> to vector<2x128xf32>
    %24 = arith.addf %21, %23 : vector<2x128xf32>
    %cst_19 = arith.constant 0.000000e+00 : f32
    %25 = vector.broadcast %cst_19 : f32 to vector<2x128xf32>
    %26 = arith.maximumf %24, %25 : vector<2x128xf32>
    %c0_20 = arith.constant 0 : index
    %c0_21 = arith.constant 0 : index
    %27 = vector.load %arg9[%c0_20, %c0_21] : memref<128x256xf32, #tpu.memory_space<vmem>>, vector<128x256xf32>
    %cst_22 = arith.constant dense<0.000000e+00> : vector<2x256xf32>
    %28 = tpu.matmul %26, %27, %cst_22 {dimension_numbers = #tpu.dot_dimension_numbers<[1], [0], [0], [1], [0, 0, 1, 1], [], []>} : vector<2x128xf32>, vector<128x256xf32>, vector<2x256xf32> -> vector<2x256xf32>
    %c0_23 = arith.constant 0 : index
    %c0_24 = arith.constant 0 : index
    %29 = vector.load %arg10[%c0_23, %c0_24] : memref<1x256xf32, #tpu.memory_space<vmem>>, vector<1x256xf32>
    %30 = vector.broadcast %29 : vector<1x256xf32> to vector<2x256xf32>
    %31 = arith.addf %28, %30 : vector<2x256xf32>
    %32 = arith.negf %31 : vector<2x256xf32>
    %33 = math.exp %32 : vector<2x256xf32>
    %cst_25 = arith.constant 1.000000e+00 : f32
    %34 = vector.broadcast %cst_25 : f32 to vector<2x256xf32>
    %35 = arith.addf %34, %33 : vector<2x256xf32>
    %36 = arith.divf %34, %35 : vector<2x256xf32>
    %c0_26 = arith.constant 0 : index
    %c0_27 = arith.constant 0 : index
    %37 = vector.load %arg11[%c0_26, %c0_27] : memref<2x256xf32, #tpu.memory_space<vmem>>, vector<2x256xf32>
    tpu.vector_store %arg11[%c0_26, %c0_27], %36 {strides = array<i32>} : memref<2x256xf32, #tpu.memory_space<vmem>>, vector<2x256xf32>,
    return
  }
  func.func @transform_0(%arg0: i32) -> (i32, i32) {
    %c0_i32 = arith.constant 0 : i32
    %c0_i32_0 = arith.constant 0 : i32
    return %arg0, %c0_i32 : i32, i32
  }
  func.func @transform_1(%arg0: i32) -> (i32, i32) {
    %c0_i32 = arith.constant 0 : i32
    %c0_i32_0 = arith.constant 0 : i32
    return %arg0, %c0_i32 : i32, i32
  }
  func.func @transform_2(%arg0: i32) -> (i32, i32) {
    %c0_i32 = arith.constant 0 : i32
    %c0_i32_0 = arith.constant 0 : i32
    %c0_i32_1 = arith.constant 0 : i32
    return %c0_i32, %c0_i32_0 : i32, i32
  }
  func.func @transform_3(%arg0: i32) -> (i32, i32) {
    %c0_i32 = arith.constant 0 : i32
    %c0_i32_0 = arith.constant 0 : i32
    %c0_i32_1 = arith.constant 0 : i32
    return %c0_i32, %c0_i32_0 : i32, i32
  }
  func.func @transform_4(%arg0: i32) -> (i32, i32) {
    %c0_i32 = arith.constant 0 : i32
    %c0_i32_0 = arith.constant 0 : i32
    %c0_i32_1 = arith.constant 0 : i32
    return %c0_i32, %c0_i32_0 : i32, i32
  }
  func.func @transform_5(%arg0: i32) -> (i32, i32) {
    %c0_i32 = arith.constant 0 : i32
    %c0_i32_0 = arith.constant 0 : i32
    %c0_i32_1 = arith.constant 0 : i32
    return %c0_i32, %c0_i32_0 : i32, i32
  }
  func.func @transform_6(%arg0: i32) -> (i32, i32) {
    %c0_i32 = arith.constant 0 : i32
    %c0_i32_0 = arith.constant 0 : i32
    %c0_i32_1 = arith.constant 0 : i32
    return %c0_i32, %c0_i32_0 : i32, i32
  }
  func.func @transform_7(%arg0: i32) -> (i32, i32) {
    %c0_i32 = arith.constant 0 : i32
    %c0_i32_0 = arith.constant 0 : i32
    %c0_i32_1 = arith.constant 0 : i32
    return %c0_i32, %c0_i32_0 : i32, i32
  }
  func.func @transform_8(%arg0: i32) -> (i32, i32) {
    %c0_i32 = arith.constant 0 : i32
    %c0_i32_0 = arith.constant 0 : i32
    %c0_i32_1 = arith.constant 0 : i32
    return %c0_i32, %c0_i32_0 : i32, i32
  }
  func.func @transform_9(%arg0: i32) -> (i32, i32) {
    %c0_i32 = arith.constant 0 : i32
    %c0_i32_0 = arith.constant 0 : i32
    %c0_i32_1 = arith.constant 0 : i32
    return %c0_i32, %c0_i32_0 : i32, i32
  }
  func.func @transform_10(%arg0: i32) -> (i32, i32) {
    %c0_i32 = arith.constant 0 : i32
    %c0_i32_0 = arith.constant 0 : i32
    return %arg0, %c0_i32 : i32, i32
  }
}

</mosaic_0001>

<llo_original>
// kernel: tpu_custom_call.1
$region0: #{tpu_custom_call.1}
  #allocation0 [shape = 'u32[]', space=smem, size = 0x4, offset = 0x4, fixed_abs, tag = 'smem constant byte address 0x4 - core index']
  #allocation1 [shape = 'u32[144,128]{1,0:T(1,128)}', space=vmem, size = 0x12000, scoped, tag = 'internal scratch']
  %s0 = inlined_call_operand.hbm [shape: f32[2,256], index: 0, kind: input, shape index: {}]
  %s1 = inlined_call_operand.vmem [shape: s32[2,1], index: 1, kind: input, shape index: {}]
  %s2 = inlined_call_operand.hbm [shape: f32[256,128], index: 2, kind: input, shape index: {}]
  %s3 = inlined_call_operand.hbm [shape: f32[128,128], index: 3, kind: input, shape index: {}]
  %s4 = inlined_call_operand.vmem [shape: f32[1,128], index: 4, kind: input, shape index: {}]
  %s5 = inlined_call_operand.hbm [shape: f32[128,128], index: 5, kind: input, shape index: {}]
  %s6 = inlined_call_operand.vmem [shape: f32[1,128], index: 6, kind: input, shape index: {}]
  %s7 = inlined_call_operand.hbm [shape: f32[128,128], index: 7, kind: input, shape index: {}]
  %s8 = inlined_call_operand.hbm [shape: f32[128,256], index: 8, kind: input, shape index: {}]
  %s9 = inlined_call_operand.vmem [shape: f32[1,256], index: 9, kind: input, shape index: {}]
  %s10 = inlined_call_operand.hbm [shape: f32[2,256], index: 10, kind: output, shape index: {}]
  %s11 = sld [smem:[#allocation0]]
  $region74: #{tpu_custom_call.1} parent=0
    _
  %s13 = ssub.s32 1, %s11
  %s14 = scalar_select 0, %s13, %s11
  $region1: #{tpu_custom_call.1} parent=0
    #allocation2 [shape = 'u8[2048]{0}', space=vmem, size = 0x800, scoped, tag = 'input window, operand 0, single buffered']
    #allocation3 [shape = 's32[1]{0}', space=sflag, size = 0x4, scoped, tag = 'scoped memory for tpu_custom_call.1']
    #allocation4 [shape = 's32[1]{0}', space=sflag, size = 0x4, scoped, tag = 'scoped memory for tpu_custom_call.1']
    #allocation5 [shape = 'u8[131072]{0}', space=vmem, size = 0x20000, scoped, tag = 'input window, operand 2, single buffered']
    #allocation6 [shape = 's32[1]{0}', space=sflag, size = 0x4, scoped, tag = 'scoped memory for tpu_custom_call.1']
    #allocation7 [shape = 'u8[65536]{0}', space=vmem, size = 0x10000, scoped, tag = 'input window, operand 3, single buffered']
    #allocation8 [shape = 'u8[65536]{0}', space=vmem, size = 0x10000, scoped, tag = 'input window, operand 5, single buffered']
    #allocation9 [shape = 's32[1]{0}', space=sflag, size = 0x4, scoped, tag = 'scoped memory for tpu_custom_call.1']
    #allocation10 [shape = 'u8[65536]{0}', space=vmem, size = 0x10000, scoped, tag = 'input window, operand 7, single buffered']
    #allocation11 [shape = 'u8[131072]{0}', space=vmem, size = 0x20000, scoped, tag = 'input window, operand 8, single buffered']
    #allocation12 [shape = 's32[1]{0}', space=sflag, size = 0x4, scoped, tag = 'scoped memory for tpu_custom_call.1']
    #allocation13 [shape = 'u8[2048]{0}', space=vmem, size = 0x800, scoped, tag = 'output window, operand 0, single buffered']
    %15 = vsyncpa [#allocation3], 0
    %16 = vsyncpa [#allocation6], 0
    %17 = vsyncpa [#allocation9], 0
    %18 = vsyncpa [#allocation12], 0
    %19 = vsyncpa [#allocation4], 0
    // Predicated region
    $region2: #{tpu_custom_call.1} parent=1 // pred_check
      _
    $region3: #{tpu_custom_call.1} parent=1 // pred_check_branch
      %21 = sbr.rel (0) target = $region5
    $region4: #{tpu_custom_call.1} parent=1 // pred_region
      %s23 = ssub.s32 64, 64
      %24 = vsyncadd [#allocation3], %s23
      %s26 = sshll.u32 [#allocation2], 4
      %s27 = int_to_ptr.vmem [resolvable:$true] %s26
      %29 = dma.hbm_to_vmem [thread:$0]  %s0, 64, %s27, [#allocation3]
    $region5: #{tpu_custom_call.1} parent=1 // pred_fallthru
      _
    // Predicated region
    $region6: #{tpu_custom_call.1} parent=1 // pred_check
      _
    $region7: #{tpu_custom_call.1} parent=1 // pred_check_branch
      %31 = sbr.rel (0) target = $region9
    $region8: #{tpu_custom_call.1} parent=1 // pred_region
      _
    $region9: #{tpu_custom_call.1} parent=1 // pred_fallthru
      _
    // Predicated region
    $region10: #{tpu_custom_call.1} parent=1 // pred_check
      _
    $region11: #{tpu_custom_call.1} parent=1 // pred_check_branch
      %33 = sbr.rel (0) target = $region13
    $region12: #{tpu_custom_call.1} parent=1 // pred_region
      %s35 = ssub.s32 4096, 4096
      %36 = vsyncadd [#allocation6], %s35
      %s37 = sshll.u32 [#allocation5], 4
      %s38 = int_to_ptr.vmem [resolvable:$true] %s37
      %43 = dma.hbm_to_vmem [thread:$0]  %s2, 4096, %s38, [#allocation6], 128, 128, 8
    $region13: #{tpu_custom_call.1} parent=1 // pred_fallthru
      _
    // Predicated region
    $region14: #{tpu_custom_call.1} parent=1 // pred_check
      _
    $region15: #{tpu_custom_call.1} parent=1 // pred_check_branch
      %45 = sbr.rel (0) target = $region17
    $region16: #{tpu_custom_call.1} parent=1 // pred_region
      %s47 = ssub.s32 2048, 2048
      %48 = vsyncadd [#allocation6], %s47
      %s49 = sshll.u32 [#allocation7], 4
      %s50 = int_to_ptr.vmem [resolvable:$true] %s49
      %55 = dma.hbm_to_vmem [thread:$0]  %s3, 2048, %s50, [#allocation6], 128, 128, 8
    $region17: #{tpu_custom_call.1} parent=1 // pred_fallthru
      _
    // Predicated region
    $region18: #{tpu_custom_call.1} parent=1 // pred_check
      _
    $region19: #{tpu_custom_call.1} parent=1 // pred_check_branch
      %57 = sbr.rel (0) target = $region21
    $region20: #{tpu_custom_call.1} parent=1 // pred_region
      _
    $region21: #{tpu_custom_call.1} parent=1 // pred_fallthru
      _
    // Predicated region
    $region22: #{tpu_custom_call.1} parent=1 // pred_check
      _
    $region23: #{tpu_custom_call.1} parent=1 // pred_check_branch
      %59 = sbr.rel (0) target = $region25
    $region24: #{tpu_custom_call.1} parent=1 // pred_region
      %s61 = ssub.s32 2048, 2048
      %62 = vsyncadd [#allocation9], %s61
      %s63 = sshll.u32 [#allocation8], 4
      %s64 = int_to_ptr.vmem [resolvable:$true] %s63
      %69 = dma.hbm_to_vmem [thread:$0]  %s5, 2048, %s64, [#allocation9], 128, 128, 8
    $region25: #{tpu_custom_call.1} parent=1 // pred_fallthru
      _
    // Predicated region
    $region26: #{tpu_custom_call.1} parent=1 // pred_check
      _
    $region27: #{tpu_custom_call.1} parent=1 // pred_check_branch
      %71 = sbr.rel (0) target = $region29
    $region28: #{tpu_custom_call.1} parent=1 // pred_region
      _
    $region29: #{tpu_custom_call.1} parent=1 // pred_fallthru
      _
    // Predicated region
    $region30: #{tpu_custom_call.1} parent=1 // pred_check
      _
    $region31: #{tpu_custom_call.1} parent=1 // pred_check_branch
      %73 = sbr.rel (0) target = $region33
    $region32: #{tpu_custom_call.1} parent=1 // pred_region
      %s75 = ssub.s32 2048, 2048
      %76 = vsyncadd [#allocation9], %s75
      %s77 = sshll.u32 [#allocation10], 4
      %s78 = int_to_ptr.vmem [resolvable:$true] %s77
      %83 = dma.hbm_to_vmem [thread:$0]  %s7, 2048, %s78, [#allocation9], 128, 128, 8
    $region33: #{tpu_custom_call.1} parent=1 // pred_fallthru
      _
    // Predicated region
    $region34: #{tpu_custom_call.1} parent=1 // pred_check
      _
    $region35: #{tpu_custom_call.1} parent=1 // pred_check_branch
      %85 = sbr.rel (0) target = $region37
    $region36: #{tpu_custom_call.1} parent=1 // pred_region
      %s87 = ssub.s32 4096, 4096
      %88 = vsyncadd [#allocation12], %s87
      %s89 = sshll.u32 [#allocation11], 4
      %s90 = int_to_ptr.vmem [resolvable:$true] %s89
      %95 = dma.hbm_to_vmem [thread:$0]  %s8, 4096, %s90, [#allocation12], 256, 256, 16
    $region37: #{tpu_custom_call.1} parent=1 // pred_fallthru
      _
    // Predicated region
    $region38: #{tpu_custom_call.1} parent=1 // pred_check
      _
    $region39: #{tpu_custom_call.1} parent=1 // pred_check_branch
      %97 = sbr.rel (0) target = $region41
    $region40: #{tpu_custom_call.1} parent=1 // pred_region
      _
    $region41: #{tpu_custom_call.1} parent=1 // pred_fallthru
      _
    // Predicated region
    $region42: #{tpu_custom_call.1} parent=1 // pred_check
      _
    $region43: #{tpu_custom_call.1} parent=1 // pred_check_branch
      %99 = sbr.rel (0) target = $region45
    $region44: #{tpu_custom_call.1} parent=1 // pred_region
      %100 = dma.done [#allocation3], 64
    $region45: #{tpu_custom_call.1} parent=1 // pred_fallthru
      _
    // Predicated region
    $region46: #{tpu_custom_call.1} parent=1 // pred_check
      _
    $region47: #{tpu_custom_call.1} parent=1 // pred_check_branch
      %102 = sbr.rel (0) target = $region49
    $region48: #{tpu_custom_call.1} parent=1 // pred_region
      %103 = dma.done [#allocation6], 4096
    $region49: #{tpu_custom_call.1} parent=1 // pred_fallthru
      _
    // Predicated region
    $region50: #{tpu_custom_call.1} parent=1 // pred_check
      _
    $region51: #{tpu_custom_call.1} parent=1 // pred_check_branch
      %105 = sbr.rel (0) target = $region53
    $region52: #{tpu_custom_call.1} parent=1 // pred_region
      %106 = dma.done [#allocation6], 2048
    $region53: #{tpu_custom_call.1} parent=1 // pred_fallthru
      _
    // Predicated region
    $region54: #{tpu_custom_call.1} parent=1 // pred_check
      _
    $region55: #{tpu_custom_call.1} parent=1 // pred_check_branch
      %108 = sbr.rel (0) target = $region57
    $region56: #{tpu_custom_call.1} parent=1 // pred_region
      %109 = dma.done [#allocation9], 2048
    $region57: #{tpu_custom_call.1} parent=1 // pred_fallthru
      _
    // Predicated region
    $region58: #{tpu_custom_call.1} parent=1 // pred_check
      _
    $region59: #{tpu_custom_call.1} parent=1 // pred_check_branch
      %111 = sbr.rel (0) target = $region61
    $region60: #{tpu_custom_call.1} parent=1 // pred_region
      %112 = dma.done [#allocation9], 2048
    $region61: #{tpu_custom_call.1} parent=1 // pred_fallthru
      _
    // Predicated region
    $region62: #{tpu_custom_call.1} parent=1 // pred_check
      _
    $region63: #{tpu_custom_call.1} parent=1 // pred_check_branch
      %114 = sbr.rel (0) target = $region65
    $region64: #{tpu_custom_call.1} parent=1 // pred_region
      %115 = dma.done [#allocation12], 4096
    $region65: #{tpu_custom_call.1} parent=1 // pred_fallthru
      _
    %v116 = vld [vmem:[#allocation2] sm:$0xf]
    %v117 = vld [vmem:[%s1] sm:$0x3]
    %v118 = vlaneseq
    %v119 = vand.u32 %v118, 127
    %120 = vset.pattern.permute.xlu0 0
    %121 = vperm.xlu0 %120, %v117
    %v122 = vpop.permute.xlu0 %121
    %vm123 = vcmp.eq.s32.totalorder %v119, %v122
    %v124 = vsel %vm123, 1, 0
    %v125 = vcvt.s32.f32 %v124
    %v126 = vld [vmem:[#allocation5] sm:$0xff]
    %v127 = vld [vmem:[#allocation5 + $0x8] sm:$0xff]
    %v128 = vld [vmem:[#allocation5 + $0x10] sm:$0xff]
    %v129 = vld [vmem:[#allocation5 + $0x18] sm:$0xff]
    %v130 = vld [vmem:[#allocation5 + $0x20] sm:$0xff]
    %v131 = vld [vmem:[#allocation5 + $0x28] sm:$0xff]
    %v132 = vld [vmem:[#allocation5 + $0x30] sm:$0xff]
    %v133 = vld [vmem:[#allocation5 + $0x38] sm:$0xff]
    %v134 = vld [vmem:[#allocation5 + $0x40] sm:$0xff]
    %v135 = vld [vmem:[#allocation5 + $0x48] sm:$0xff]
    %v136 = vld [vmem:[#allocation5 + $0x50] sm:$0xff]
    %v137 = vld [vmem:[#allocation5 + $0x58] sm:$0xff]
    %v138 = vld [vmem:[#allocation5 + $0x60] sm:$0xff]
    %v139 = vld [vmem:[#allocation5 + $0x68] sm:$0xff]
    %v140 = vld [vmem:[#allocation5 + $0x70] sm:$0xff]
    %v141 = vld [vmem:[#allocation5 + $0x78] sm:$0xff]
    %v142 = vld [vmem:[#allocation5 + $0x80] sm:$0xff]
    %v143 = vld [vmem:[#allocation5 + $0x88] sm:$0xff]
    %v144 = vld [vmem:[#allocation5 + $0x90] sm:$0xff]
    %v145 = vld [vmem:[#allocation5 + $0x98] sm:$0xff]
    %v146 = vld [vmem:[#allocation5 + $0xa0] sm:$0xff]
    %v147 = vld [vmem:[#allocation5 + $0xa8] sm:$0xff]
    %v148 = vld [vmem:[#allocation5 + $0xb0] sm:$0xff]
    %v149 = vld [vmem:[#allocation5 + $0xb8] sm:$0xff]
    %v150 = vld [vmem:[#allocation5 + $0xc0] sm:$0xff]
    %v151 = vld [vmem:[#allocation5 + $0xc8] sm:$0xff]
    %v152 = vld [vmem:[#allocation5 + $0xd0] sm:$0xff]
    %v153 = vld [vmem:[#allocation5 + $0xd8] sm:$0xff]
    %v154 = vld [vmem:[#allocation5 + $0xe0] sm:$0xff]
    %v155 = vld [vmem:[#allocation5 + $0xe8] sm:$0xff]
    %v156 = vld [vmem:[#allocation5 + $0xf0] sm:$0xff]
    %v157 = vld [vmem:[#allocation5 + $0xf8] sm:$0xff]
    %v158 = vld [vmem:[#allocation7] sm:$0xff]
    %v159 = vld [vmem:[#allocation7 + $0x8] sm:$0xff]
    %v160 = vld [vmem:[#allocation7 + $0x10] sm:$0xff]
    %v161 = vld [vmem:[#allocation7 + $0x18] sm:$0xff]
    %v162 = vld [vmem:[#allocation7 + $0x20] sm:$0xff]
    %v163 = vld [vmem:[#allocation7 + $0x28] sm:$0xff]
    %v164 = vld [vmem:[#allocation7 + $0x30] sm:$0xff]
    %v165 = vld [vmem:[#allocation7 + $0x38] sm:$0xff]
    %v166 = vld [vmem:[#allocation7 + $0x40] sm:$0xff]
    %v167 = vld [vmem:[#allocation7 + $0x48] sm:$0xff]
    %v168 = vld [vmem:[#allocation7 + $0x50] sm:$0xff]
    %v169 = vld [vmem:[#allocation7 + $0x58] sm:$0xff]
    %v170 = vld [vmem:[#allocation7 + $0x60] sm:$0xff]
    %v171 = vld [vmem:[#allocation7 + $0x68] sm:$0xff]
    %v172 = vld [vmem:[#allocation7 + $0x70] sm:$0xff]
    %v173 = vld [vmem:[#allocation7 + $0x78] sm:$0xff]
    %174 = vmatprep.subr.mxu0 0.0
    %175 = vmatpush1.msra.mxu0 %v173
    %176 = vmatprep.subr.mxu0 0.0
    %177 = vmatpush1.msra.mxu0 %v172
    %178 = vmatprep.subr.mxu0 0.0
    %179 = vmatpush1.msra.mxu0 %v171
    %180 = vmatprep.subr.mxu0 0.0
    %181 = vmatpush1.msra.mxu0 %v170
    %182 = vmatprep.subr.mxu0 0.0
    %183 = vmatpush1.msra.mxu0 %v169
    %184 = vmatprep.subr.mxu0 0.0
    %185 = vmatpush1.msra.mxu0 %v168
    %186 = vmatprep.subr.mxu0 0.0
    %187 = vmatpush1.msra.mxu0 %v167
    %188 = vmatprep.subr.mxu0 0.0
    %189 = vmatpush1.msra.mxu0 %v166
    %190 = vmatprep.subr.mxu0 0.0
    %191 = vmatpush1.msra.mxu0 %v165
    %192 = vmatprep.subr.mxu0 0.0
    %193 = vmatpush1.msra.mxu0 %v164
    %194 = vmatprep.subr.mxu0 0.0
    %195 = vmatpush1.msra.mxu0 %v163
    %196 = vmatprep.subr.mxu0 0.0
    %197 = vmatpush1.msra.mxu0 %v162
    %198 = vmatprep.subr.mxu0 0.0
    %199 = vmatpush1.msra.mxu0 %v161
    %200 = vmatprep.subr.mxu0 0.0
    %201 = vmatpush1.msra.mxu0 %v160
    %202 = vmatprep.subr.mxu0 0.0
    %203 = vmatpush1.msra.mxu0 %v159
    %204 = vmatprep.subr.mxu0 0.0
    %205 = vmatpush1.msra.mxu0 %v158
    %206 = vmatprep.subr.mxu0 0.0
    %207 = vmatpush2.msra.mxu0 0.0
    %208 = vmatprep.subr.mxu0 0.0
    %209 = vmatpush2.msra.mxu0 0.0
    %210 = vmatprep.subr.mxu0 0.0
    %211 = vmatpush2.msra.mxu0 0.0
    %212 = vmatprep.subr.mxu0 0.0
    %213 = vmatpush2.msra.mxu0 0.0
    %214 = vmatprep.subr.mxu0 0.0
    %215 = vmatpush2.msra.mxu0 0.0
    %216 = vmatprep.subr.mxu0 0.0
    %217 = vmatpush2.msra.mxu0 0.0
    %218 = vmatprep.subr.mxu0 0.0
    %219 = vmatpush2.msra.mxu0 0.0
    %220 = vmatprep.subr.mxu0 0.0
    %221 = vmatpush2.msra.mxu0 0.0
    %222 = vmatprep.subr.mxu0 0.0
    %223 = vmatpush2.msra.mxu0 0.0
    %224 = vmatprep.subr.mxu0 0.0
    %225 = vmatpush2.msra.mxu0 0.0
    %226 = vmatprep.subr.mxu0 0.0
    %227 = vmatpush2.msra.mxu0 0.0
    %228 = vmatprep.subr.mxu0 0.0
    %229 = vmatpush2.msra.mxu0 0.0
    %230 = vmatprep.subr.mxu0 0.0
    %231 = vmatpush2.msra.mxu0 0.0
    %232 = vmatprep.subr.mxu0 0.0
    %233 = vmatpush2.msra.mxu0 0.0
    %234 = vmatprep.subr.mxu0 0.0
    %235 = vmatpush2.msra.mxu0 0.0
    %236 = vmatprep.subr.mxu0 0.0
    %237 = vmatpush2.msra.mxu0 0.0
    %238 = vmatprep.mubr.f32.mxu0 0.0
    %239 = vmatmul.mubr.f32.gmra.mxu0 %v125
    %v240 = vpop.f32.mrf.mxu0
    %v241 = vadd.f32 0.0, %v240
    %v242 = vpop.f32.mrf.mxu0
    %243 = vdwg.mxu0
    %v246 = vunpack.c.l.s4 1983009808
    %v247 = vunpack.c.0.s8 %v246
    %v248 = vlaneseq
    %v249 = vshrl.u32 %v248, 7
    %v250 = vsub.s32 %v247, %v249
    %v251 = vrot.slane %v116, %v250
    %v252 = vcombine.high %v251, %v251
    %255 = vmatprep.subr.mxu0 0.0
    %256 = vmatpush1.msra.mxu0 %v141
    %257 = vmatprep.subr.mxu0 0.0
    %258 = vmatpush1.msra.mxu0 %v140
    %259 = vmatprep.subr.mxu0 0.0
    %260 = vmatpush1.msra.mxu0 %v139
    %261 = vmatprep.subr.mxu0 0.0
    %262 = vmatpush1.msra.mxu0 %v138
    %263 = vmatprep.subr.mxu0 0.0
    %264 = vmatpush1.msra.mxu0 %v137
    %265 = vmatprep.subr.mxu0 0.0
    %266 = vmatpush1.msra.mxu0 %v136
    %267 = vmatprep.subr.mxu0 0.0
    %268 = vmatpush1.msra.mxu0 %v135
    %269 = vmatprep.subr.mxu0 0.0
    %270 = vmatpush1.msra.mxu0 %v134
    %271 = vmatprep.subr.mxu0 0.0
    %272 = vmatpush1.msra.mxu0 %v133
    %273 = vmatprep.subr.mxu0 0.0
    %274 = vmatpush1.msra.mxu0 %v132
    %275 = vmatprep.subr.mxu0 0.0
    %276 = vmatpush1.msra.mxu0 %v131
    %277 = vmatprep.subr.mxu0 0.0
    %278 = vmatpush1.msra.mxu0 %v130
    %279 = vmatprep.subr.mxu0 0.0
    %280 = vmatpush1.msra.mxu0 %v129
    %281 = vmatprep.subr.mxu0 0.0
    %282 = vmatpush1.msra.mxu0 %v128
    %283 = vmatprep.subr.mxu0 0.0
    %284 = vmatpush1.msra.mxu0 %v127
    %285 = vmatprep.subr.mxu0 0.0
    %286 = vmatpush1.msra.mxu0 %v126
    %287 = vmatprep.subr.mxu0 0.0
    %288 = vmatpush2.msra.mxu0 %v157
    %289 = vmatprep.subr.mxu0 0.0
    %290 = vmatpush2.msra.mxu0 %v156
    %291 = vmatprep.subr.mxu0 0.0
    %292 = vmatpush2.msra.mxu0 %v155
    %293 = vmatprep.subr.mxu0 0.0
    %294 = vmatpush2.msra.mxu0 %v154
    %295 = vmatprep.subr.mxu0 0.0
    %296 = vmatpush2.msra.mxu0 %v153
    %297 = vmatprep.subr.mxu0 0.0
    %298 = vmatpush2.msra.mxu0 %v152
    %299 = vmatprep.subr.mxu0 0.0
    %300 = vmatpush2.msra.mxu0 %v151
    %301 = vmatprep.subr.mxu0 0.0
    %302 = vmatpush2.msra.mxu0 %v150
    %303 = vmatprep.subr.mxu0 0.0
    %304 = vmatpush2.msra.mxu0 %v149
    %305 = vmatprep.subr.mxu0 0.0
    %306 = vmatpush2.msra.mxu0 %v148
    %307 = vmatprep.subr.mxu0 0.0
    %308 = vmatpush2.msra.mxu0 %v147
    %309 = vmatprep.subr.mxu0 0.0
    %310 = vmatpush2.msra.mxu0 %v146
    %311 = vmatprep.subr.mxu0 0.0
    %312 = vmatpush2.msra.mxu0 %v145
    %313 = vmatprep.subr.mxu0 0.0
    %314 = vmatpush2.msra.mxu0 %v144
    %315 = vmatprep.subr.mxu0 0.0
    %316 = vmatpush2.msra.mxu0 %v143
    %317 = vmatprep.subr.mxu0 0.0
    %318 = vmatpush2.msra.mxu0 %v142
    %319 = vmatprep.mubr.f32.mxu0 %v252
    %320 = vmatmul.mubr.f32.gmra.mxu0 %v251
    %v321 = vpop.f32.mrf.mxu0
    %v322 = vadd.f32 %v241, %v321
    %v323 = vpop.f32.mrf.mxu0
    %324 = vdwg.mxu0
    %v325 = vld [vmem:[%s4] sm:$0x1]
    %v327 = vlaneseq
    %v328 = vshrl.u32 %v327, 7
    %v329 = vsub.s32 0, %v328
    %v330 = vrot.slane %v325, %v329
    %v332 = vadd.f32 %v322, %v330
    %v333 = vmax.f32 %v332, 0.0
    %v334 = vld [vmem:[#allocation8] sm:$0xff]
    %v335 = vld [vmem:[#allocation8 + $0x8] sm:$0xff]
    %v336 = vld [vmem:[#allocation8 + $0x10] sm:$0xff]
    %v337 = vld [vmem:[#allocation8 + $0x18] sm:$0xff]
    %v338 = vld [vmem:[#allocation8 + $0x20] sm:$0xff]
    %v339 = vld [vmem:[#allocation8 + $0x28] sm:$0xff]
    %v340 = vld [vmem:[#allocation8 + $0x30] sm:$0xff]
    %v341 = vld [vmem:[#allocation8 + $0x38] sm:$0xff]
    %v342 = vld [vmem:[#allocation8 + $0x40] sm:$0xff]
    %v343 = vld [vmem:[#allocation8 + $0x48] sm:$0xff]
    %v344 = vld [vmem:[#allocation8 + $0x50] sm:$0xff]
    %v345 = vld [vmem:[#allocation8 + $0x58] sm:$0xff]
    %v346 = vld [vmem:[#allocation8 + $0x60] sm:$0xff]
    %v347 = vld [vmem:[#allocation8 + $0x68] sm:$0xff]
    %v348 = vld [vmem:[#allocation8 + $0x70] sm:$0xff]
    %v349 = vld [vmem:[#allocation8 + $0x78] sm:$0xff]
    %v350 = vld [vmem:[#allocation10] sm:$0xff]
    %v351 = vld [vmem:[#allocation10 + $0x8] sm:$0xff]
    %v352 = vld [vmem:[#allocation10 + $0x10] sm:$0xff]
    %v353 = vld [vmem:[#allocation10 + $0x18] sm:$0xff]
    %v354 = vld [vmem:[#allocation10 + $0x20] sm:$0xff]
    %v355 = vld [vmem:[#allocation10 + $0x28] sm:$0xff]
    %v356 = vld [vmem:[#allocation10 + $0x30] sm:$0xff]
    %v357 = vld [vmem:[#allocation10 + $0x38] sm:$0xff]
    %v358 = vld [vmem:[#allocation10 + $0x40] sm:$0xff]
    %v359 = vld [vmem:[#allocation10 + $0x48] sm:$0xff]
    %v360 = vld [vmem:[#allocation10 + $0x50] sm:$0xff]
    %v361 = vld [vmem:[#allocation10 + $0x58] sm:$0xff]
    %v362 = vld [vmem:[#allocation10 + $0x60] sm:$0xff]
    %v363 = vld [vmem:[#allocation10 + $0x68] sm:$0xff]
    %v364 = vld [vmem:[#allocation10 + $0x70] sm:$0xff]
    %v365 = vld [vmem:[#allocation10 + $0x78] sm:$0xff]
    %366 = vmatprep.subr.mxu0 0.0
    %367 = vmatpush1.msra.mxu0 %v365
    %368 = vmatprep.subr.mxu0 0.0
    %369 = vmatpush1.msra.mxu0 %v364
    %370 = vmatprep.subr.mxu0 0.0
    %371 = vmatpush1.msra.mxu0 %v363
    %372 = vmatprep.subr.mxu0 0.0
    %373 = vmatpush1.msra.mxu0 %v362
    %374 = vmatprep.subr.mxu0 0.0
    %375 = vmatpush1.msra.mxu0 %v361
    %376 = vmatprep.subr.mxu0 0.0
    %377 = vmatpush1.msra.mxu0 %v360
    %378 = vmatprep.subr.mxu0 0.0
    %379 = vmatpush1.msra.mxu0 %v359
    %380 = vmatprep.subr.mxu0 0.0
    %381 = vmatpush1.msra.mxu0 %v358
    %382 = vmatprep.subr.mxu0 0.0
    %383 = vmatpush1.msra.mxu0 %v357
    %384 = vmatprep.subr.mxu0 0.0
    %385 = vmatpush1.msra.mxu0 %v356
    %386 = vmatprep.subr.mxu0 0.0
    %387 = vmatpush1.msra.mxu0 %v355
    %388 = vmatprep.subr.mxu0 0.0
    %389 = vmatpush1.msra.mxu0 %v354
    %390 = vmatprep.subr.mxu0 0.0
    %391 = vmatpush1.msra.mxu0 %v353
    %392 = vmatprep.subr.mxu0 0.0
    %393 = vmatpush1.msra.mxu0 %v352
    %394 = vmatprep.subr.mxu0 0.0
    %395 = vmatpush1.msra.mxu0 %v351
    %396 = vmatprep.subr.mxu0 0.0
    %397 = vmatpush1.msra.mxu0 %v350
    %398 = vmatprep.subr.mxu0 0.0
    %399 = vmatpush2.msra.mxu0 0.0
    %400 = vmatprep.subr.mxu0 0.0
    %401 = vmatpush2.msra.mxu0 0.0
    %402 = vmatprep.subr.mxu0 0.0
    %403 = vmatpush2.msra.mxu0 0.0
    %404 = vmatprep.subr.mxu0 0.0
    %405 = vmatpush2.msra.mxu0 0.0
    %406 = vmatprep.subr.mxu0 0.0
    %407 = vmatpush2.msra.mxu0 0.0
    %408 = vmatprep.subr.mxu0 0.0
    %409 = vmatpush2.msra.mxu0 0.0
    %410 = vmatprep.subr.mxu0 0.0
    %411 = vmatpush2.msra.mxu0 0.0
    %412 = vmatprep.subr.mxu0 0.0
    %413 = vmatpush2.msra.mxu0 0.0
    %414 = vmatprep.subr.mxu0 0.0
    %415 = vmatpush2.msra.mxu0 0.0
    %416 = vmatprep.subr.mxu0 0.0
    %417 = vmatpush2.msra.mxu0 0.0
    %418 = vmatprep.subr.mxu0 0.0
    %419 = vmatpush2.msra.mxu0 0.0
    %420 = vmatprep.subr.mxu0 0.0
    %421 = vmatpush2.msra.mxu0 0.0
    %422 = vmatprep.subr.mxu0 0.0
    %423 = vmatpush2.msra.mxu0 0.0
    %424 = vmatprep.subr.mxu0 0.0
    %425 = vmatpush2.msra.mxu0 0.0
    %426 = vmatprep.subr.mxu0 0.0
    %427 = vmatpush2.msra.mxu0 0.0
    %428 = vmatprep.subr.mxu0 0.0
    %429 = vmatpush2.msra.mxu0 0.0
    %430 = vmatprep.mubr.f32.mxu0 0.0
    %431 = vmatmul.mubr.f32.gmra.mxu0 %v125
    %v432 = vpop.f32.mrf.mxu0
    %v433 = vadd.f32 0.0, %v432
    %v434 = vpop.f32.mrf.mxu0
    %435 = vdwg.mxu0
    %436 = vmatprep.subr.mxu0 0.0
    %437 = vmatpush1.msra.mxu0 %v349
    %438 = vmatprep.subr.mxu0 0.0
    %439 = vmatpush1.msra.mxu0 %v348
    %440 = vmatprep.subr.mxu0 0.0
    %441 = vmatpush1.msra.mxu0 %v347
    %442 = vmatprep.subr.mxu0 0.0
    %443 = vmatpush1.msra.mxu0 %v346
    %444 = vmatprep.subr.mxu0 0.0
    %445 = vmatpush1.msra.mxu0 %v345
    %446 = vmatprep.subr.mxu0 0.0
    %447 = vmatpush1.msra.mxu0 %v344
    %448 = vmatprep.subr.mxu0 0.0
    %449 = vmatpush1.msra.mxu0 %v343
    %450 = vmatprep.subr.mxu0 0.0
    %451 = vmatpush1.msra.mxu0 %v342
    %452 = vmatprep.subr.mxu0 0.0
    %453 = vmatpush1.msra.mxu0 %v341
    %454 = vmatprep.subr.mxu0 0.0
    %455 = vmatpush1.msra.mxu0 %v340
    %456 = vmatprep.subr.mxu0 0.0
    %457 = vmatpush1.msra.mxu0 %v339
    %458 = vmatprep.subr.mxu0 0.0
    %459 = vmatpush1.msra.mxu0 %v338
    %460 = vmatprep.subr.mxu0 0.0
    %461 = vmatpush1.msra.mxu0 %v337
    %462 = vmatprep.subr.mxu0 0.0
    %463 = vmatpush1.msra.mxu0 %v336
    %464 = vmatprep.subr.mxu0 0.0
    %465 = vmatpush1.msra.mxu0 %v335
    %466 = vmatprep.subr.mxu0 0.0
    %467 = vmatpush1.msra.mxu0 %v334
    %468 = vmatprep.subr.mxu0 0.0
    %469 = vmatpush2.msra.mxu0 0.0
    %470 = vmatprep.subr.mxu0 0.0
    %471 = vmatpush2.msra.mxu0 0.0
    %472 = vmatprep.subr.mxu0 0.0
    %473 = vmatpush2.msra.mxu0 0.0
    %474 = vmatprep.subr.mxu0 0.0
    %475 = vmatpush2.msra.mxu0 0.0
    %476 = vmatprep.subr.mxu0 0.0
    %477 = vmatpush2.msra.mxu0 0.0
    %478 = vmatprep.subr.mxu0 0.0
    %479 = vmatpush2.msra.mxu0 0.0
    %480 = vmatprep.subr.mxu0 0.0
    %481 = vmatpush2.msra.mxu0 0.0
    %482 = vmatprep.subr.mxu0 0.0
    %483 = vmatpush2.msra.mxu0 0.0
    %484 = vmatprep.subr.mxu0 0.0
    %485 = vmatpush2.msra.mxu0 0.0
    %486 = vmatprep.subr.mxu0 0.0
    %487 = vmatpush2.msra.mxu0 0.0
    %488 = vmatprep.subr.mxu0 0.0
    %489 = vmatpush2.msra.mxu0 0.0
    %490 = vmatprep.subr.mxu0 0.0
    %491 = vmatpush2.msra.mxu0 0.0
    %492 = vmatprep.subr.mxu0 0.0
    %493 = vmatpush2.msra.mxu0 0.0
    %494 = vmatprep.subr.mxu0 0.0
    %495 = vmatpush2.msra.mxu0 0.0
    %496 = vmatprep.subr.mxu0 0.0
    %497 = vmatpush2.msra.mxu0 0.0
    %498 = vmatprep.subr.mxu0 0.0
    %499 = vmatpush2.msra.mxu0 0.0
    %500 = vmatprep.mubr.f32.mxu0 0.0
    %501 = vmatmul.mubr.f32.gmra.mxu0 %v333
    %v502 = vpop.f32.mrf.mxu0
    %v503 = vadd.f32 %v433, %v502
    %v504 = vpop.f32.mrf.mxu0
    %505 = vdwg.mxu0
    %v506 = vld [vmem:[%s6] sm:$0x1]
    %v508 = vlaneseq
    %v509 = vshrl.u32 %v508, 7
    %v510 = vsub.s32 0, %v509
    %v511 = vrot.slane %v506, %v510
    %v513 = vadd.f32 %v503, %v511
    %v514 = vmax.f32 %v513, 0.0
    %v515 = vld [vmem:[#allocation11] sm:$0xff]
    %v516 = vld [vmem:[#allocation11 + $0x8] sm:$0xff]
    %v517 = vld [vmem:[#allocation11 + $0x10] sm:$0xff]
    %v518 = vld [vmem:[#allocation11 + $0x18] sm:$0xff]
    %v519 = vld [vmem:[#allocation11 + $0x20] sm:$0xff]
    %v520 = vld [vmem:[#allocation11 + $0x28] sm:$0xff]
    %v521 = vld [vmem:[#allocation11 + $0x30] sm:$0xff]
    %v522 = vld [vmem:[#allocation11 + $0x38] sm:$0xff]
    %v523 = vld [vmem:[#allocation11 + $0x40] sm:$0xff]
    %v524 = vld [vmem:[#allocation11 + $0x48] sm:$0xff]
    %v525 = vld [vmem:[#allocation11 + $0x50] sm:$0xff]
    %v526 = vld [vmem:[#allocation11 + $0x58] sm:$0xff]
    %v527 = vld [vmem:[#allocation11 + $0x60] sm:$0xff]
    %v528 = vld [vmem:[#allocation11 + $0x68] sm:$0xff]
    %v529 = vld [vmem:[#allocation11 + $0x70] sm:$0xff]
    %v530 = vld [vmem:[#allocation11 + $0x78] sm:$0xff]
    %v531 = vld [vmem:[#allocation11 + $0x80] sm:$0xff]
    %v532 = vld [vmem:[#allocation11 + $0x88] sm:$0xff]
    %v533 = vld [vmem:[#allocation11 + $0x90] sm:$0xff]
    %v534 = vld [vmem:[#allocation11 + $0x98] sm:$0xff]
    %v535 = vld [vmem:[#allocation11 + $0xa0] sm:$0xff]
    %v536 = vld [vmem:[#allocation11 + $0xa8] sm:$0xff]
    %v537 = vld [vmem:[#allocation11 + $0xb0] sm:$0xff]
    %v538 = vld [vmem:[#allocation11 + $0xb8] sm:$0xff]
    %v539 = vld [vmem:[#allocation11 + $0xc0] sm:$0xff]
    %v540 = vld [vmem:[#allocation11 + $0xc8] sm:$0xff]
    %v541 = vld [vmem:[#allocation11 + $0xd0] sm:$0xff]
    %v542 = vld [vmem:[#allocation11 + $0xd8] sm:$0xff]
    %v543 = vld [vmem:[#allocation11 + $0xe0] sm:$0xff]
    %v544 = vld [vmem:[#allocation11 + $0xe8] sm:$0xff]
    %v545 = vld [vmem:[#allocation11 + $0xf0] sm:$0xff]
    %v546 = vld [vmem:[#allocation11 + $0xf8] sm:$0xff]
    %v547 = vld [vmem:[%s9] sm:$0x3]
    %v549 = vlaneseq
    %v550 = vshrl.u32 %v549, 7
    %v551 = vsub.s32 0, %v550
    %v552 = vrot.slane %v547, %v551
    %v553 = vlaneseq
    %v554 = vshrl.u32 %v553, 7
    %v555 = vsub.s32 1, %v554
    %v556 = vrot.slane %v547, %v555
    %559 = vmatprep.subr.mxu0 %v546
    %560 = vmatpush1.msra.mxu0 %v545
    %561 = vmatprep.subr.mxu0 %v544
    %562 = vmatpush1.msra.mxu0 %v543
    %563 = vmatprep.subr.mxu0 %v542
    %564 = vmatpush1.msra.mxu0 %v541
    %565 = vmatprep.subr.mxu0 %v540
    %566 = vmatpush1.msra.mxu0 %v539
    %567 = vmatprep.subr.mxu0 %v538
    %568 = vmatpush1.msra.mxu0 %v537
    %569 = vmatprep.subr.mxu0 %v536
    %570 = vmatpush1.msra.mxu0 %v535
    %571 = vmatprep.subr.mxu0 %v534
    %572 = vmatpush1.msra.mxu0 %v533
    %573 = vmatprep.subr.mxu0 %v532
    %574 = vmatpush1.msra.mxu0 %v531
    %575 = vmatprep.subr.mxu0 %v530
    %576 = vmatpush1.msra.mxu0 %v529
    %577 = vmatprep.subr.mxu0 %v528
    %578 = vmatpush1.msra.mxu0 %v527
    %579 = vmatprep.subr.mxu0 %v526
    %580 = vmatpush1.msra.mxu0 %v525
    %581 = vmatprep.subr.mxu0 %v524
    %582 = vmatpush1.msra.mxu0 %v523
    %583 = vmatprep.subr.mxu0 %v522
    %584 = vmatpush1.msra.mxu0 %v521
    %585 = vmatprep.subr.mxu0 %v520
    %586 = vmatpush1.msra.mxu0 %v519
    %587 = vmatprep.subr.mxu0 %v518
    %588 = vmatpush1.msra.mxu0 %v517
    %589 = vmatprep.subr.mxu0 %v516
    %590 = vmatpush1.msra.mxu0 %v515
    %591 = vmatprep.subr.mxu0 0.0
    %592 = vmatpush2.msra.mxu0 0.0
    %593 = vmatprep.subr.mxu0 0.0
    %594 = vmatpush2.msra.mxu0 0.0
    %595 = vmatprep.subr.mxu0 0.0
    %596 = vmatpush2.msra.mxu0 0.0
    %597 = vmatprep.subr.mxu0 0.0
    %598 = vmatpush2.msra.mxu0 0.0
    %599 = vmatprep.subr.mxu0 0.0
    %600 = vmatpush2.msra.mxu0 0.0
    %601 = vmatprep.subr.mxu0 0.0
    %602 = vmatpush2.msra.mxu0 0.0
    %603 = vmatprep.subr.mxu0 0.0
    %604 = vmatpush2.msra.mxu0 0.0
    %605 = vmatprep.subr.mxu0 0.0
    %606 = vmatpush2.msra.mxu0 0.0
    %607 = vmatprep.subr.mxu0 0.0
    %608 = vmatpush2.msra.mxu0 0.0
    %609 = vmatprep.subr.mxu0 0.0
    %610 = vmatpush2.msra.mxu0 0.0
    %611 = vmatprep.subr.mxu0 0.0
    %612 = vmatpush2.msra.mxu0 0.0
    %613 = vmatprep.subr.mxu0 0.0
    %614 = vmatpush2.msra.mxu0 0.0
    %615 = vmatprep.subr.mxu0 0.0
    %616 = vmatpush2.msra.mxu0 0.0
    %617 = vmatprep.subr.mxu0 0.0
    %618 = vmatpush2.msra.mxu0 0.0
    %619 = vmatprep.subr.mxu0 0.0
    %620 = vmatpush2.msra.mxu0 0.0
    %621 = vmatprep.subr.mxu0 0.0
    %622 = vmatpush2.msra.mxu0 0.0
    %623 = vmatprep.mubr.f32.mxu0 0.0
    %624 = vmatmul.mubr.f32.gmra.mxu0 %v514
    %v625 = vpop.f32.mrf.mxu0
    %v626 = vadd.f32 %v552, %v625
    %v627 = vpop.f32.mrf.mxu0
    %v628 = vadd.f32 %v556, %v627
    %629 = vdwg.mxu0
    %v630 = vxor.u32 %v626, 2147483648
    %v631 = vxor.u32 %v628, 2147483648
    %v632 = vmul.f32 %v630, 1.442695
    %v633 = vpow.pop %v632
    %v634 = vmul.f32 %v631, 1.442695
    %v635 = vpow.pop %v634
    %v636 = vadd.f32 %v633, 1.0
    %v637 = vadd.f32 %v635, 1.0
    %v638 = vrcp.pop %v636
    %v639 = vmul.f32 1.0, %v638
    %v640 = vrcp.pop %v637
    %v641 = vmul.f32 1.0, %v640
    %v644 = vcombine.low %v639, %v641
    %v646 = vunpack.c.l.s4 1983009808
    %v647 = vunpack.c.0.s8 %v646
    %v648 = vlaneseq
    %v649 = vshrl.u32 %v648, 7
    %v650 = vsub.s32 %v647, %v649
    %v651 = vrot.slane %v644, %v650
    %653 = vst [vmem:[#allocation13] sm:$0xf] %v651
    // Predicated region
    $region66: #{tpu_custom_call.1} parent=1 // pred_check
      _
    $region67: #{tpu_custom_call.1} parent=1 // pred_check_branch
      %655 = sbr.rel (0) target = $region69
    $region68: #{tpu_custom_call.1} parent=1 // pred_region
      %s657 = ssub.s32 64, 64
      %658 = vsyncadd [#allocation4], %s657
      %s660 = sshll.u32 [#allocation13], 4
      %s661 = int_to_ptr.vmem [resolvable:$true] %s660
      %663 = dma.vmem_to_hbm [thread:$0]  %s661, 64, %s10, [#allocation4]
    $region69: #{tpu_custom_call.1} parent=1 // pred_fallthru
      _
    // Predicated region
    $region70: #{tpu_custom_call.1} parent=1 // pred_check
      _
    $region71: #{tpu_custom_call.1} parent=1 // pred_check_branch
      %665 = sbr.rel (0) target = $region73
    $region72: #{tpu_custom_call.1} parent=1 // pred_region
      %666 = dma.done [#allocation4], 64
    $region73: #{tpu_custom_call.1} parent=1 // pred_fallthru
      _
    %667 = vsyncpa [#allocation3], 1
    %668 = vsyncpa [#allocation6], 1
    %669 = vsyncpa [#allocation9], 1
    %670 = vsyncpa [#allocation12], 1
    %671 = vsyncpa [#allocation4], 1

</llo_original>
